<compile_context>
chip_gen: v5e
topology: v5e:2x2
jax: 0.10.0
libtpu: 0.0.40
codegen_flags: <defaults>
</compile_context>

<pallas_src>
import functools

import jax
import jax.numpy as jnp
from jax.experimental import pallas as pl
from jax.experimental.pallas import tpu as pltpu


def _round_up(x, m):
    return (x + m - 1) // m * m


def _mfb_kernel(xg_ref, xp_ref, wd_ref, bd_ref, wi_ref, bi_ref, wp_ref, bp_ref,
                o_ref, *, factor, d_pad):
    """Fused MFB forward for one batch tile. All operands live in VMEM."""
    xg = xg_ref[...]                                              # (TB, Dp) bf16
    xp = xp_ref[...]                                              # (TB, Dp) bf16

    # Two projection linears (bf16 MXU, f32 accumulation), bias add in f32.
    g = jnp.dot(xg, wd_ref[...], preferred_element_type=jnp.float32) + bd_ref[...]
    p = jnp.dot(xp, wi_ref[...], preferred_element_type=jnp.float32) + bi_ref[...]

    # Bilinear (Hadamard) interaction (f32 VPU).
    iq = g * p                                                    # (TB, Dp*K)

    # TODO(synk): F.dropout(p=0.1) with PyTorch's default training=True is
    # omitted — implemented as identity (inference behaviour).

    # Factor-major pooling: K lane-aligned slab adds (weights were permuted
    # host-side), no cross-lane relayout.
    pooled = iq[:, 0:d_pad]
    for k in range(1, factor):
        pooled = pooled + iq[:, k * d_pad:(k + 1) * d_pad]        # (TB, Dp)

    # Signed square root: sign(x) * sqrt(|x|)  (single EUP sqrt).
    pooled = jnp.where(pooled < 0, -1.0, 1.0) * jnp.sqrt(jnp.abs(pooled))

    # Row-wise L2 normalize (F.normalize eps=1e-12) via rsqrt on EUP.
    ss = jnp.sum(pooled * pooled, axis=-1, keepdims=True)
    pooled = pooled * jax.lax.rsqrt(jnp.maximum(ss, 1e-24))

    # Prediction linear (bf16 MXU, f32 accumulation).
    logits = (jnp.dot(pooled.astype(jnp.bfloat16), wp_ref[...],
                      preferred_element_type=jnp.float32) + bp_ref[...])

    # log_softmax over the feature dim.  Padded columns carry a -1e9 bias, so
    # exp underflows to exactly 0 and the normalizer only sees real columns.
    m = jnp.max(logits, axis=-1, keepdims=True)
    s = logits - m
    lse = jnp.log(jnp.sum(jnp.exp(s), axis=-1, keepdims=True))
    o_ref[...] = (s - lse).astype(o_ref.dtype)


@functools.partial(jax.jit, static_argnames=("factor", "tile_b"))
def mfb_forward(x_gene, x_patho, w_d, b_d, w_i, b_i, w_p, b_p,
                *, factor=1, tile_b=None):
    """x_gene, x_patho: [B, in_size] f32.  Weights must come from prepare_params
    (factor-major, lane-padded, bf16).  Returns log-probs: [B, in_size] f32."""
    B, D = x_gene.shape
    Dp = _round_up(D, 128)              # lane-dense feature width
    Hp = Dp * factor                    # padded projected width
    assert w_d.shape == (Dp, Hp) and w_i.shape == (Dp, Hp) and w_p.shape == (Dp, Dp), \
        "weights must be preprocessed with prepare_params()"

    # Batch tile: >=2 grid steps whenever possible so both v7x TensorCores work.
    if tile_b is None:
        if B > 512:
            tile_b = 512
        elif B >= 16:
            tile_b = _round_up(max((B + 1) // 2, 8), 8)
        else:
            tile_b = _round_up(max(B, 1), 8)
    Bp = _round_up(B, tile_b)
    grid = (Bp // tile_b,)

    # Pad batch + feature dims; cast activations to bf16 (MXU operands, half DMA).
    def pad_in(x):
        return jnp.zeros((Bp, Dp), jnp.bfloat16).at[:B, :D].set(x.astype(jnp.bfloat16))

    xg = pad_in(x_gene)
    xp = pad_in(x_patho)

    # Explicit scoped-VMEM budget: double-buffered IO tiles + resident weights
    # (counted twice for safety) + live f32 intermediates, with ~50% headroom,
    # clamped to 64 MiB so the budget also fits v7x.
    est = (2 * (2 * tile_b * Dp * 2 + tile_b * Dp * 4)                 # xg/xp/out
           + 2 * (2 * Dp * Hp * 2 + Dp * Dp * 2 + (2 * Hp + Dp) * 4)   # weights/biases
           + 3 * tile_b * Hp * 4 + 4 * tile_b * Dp * 4)                # f32 temps
    vmem_limit = int(min(max(est * 3 // 2, 4 * 2 ** 20), 64 * 2 ** 20))

    kernel = functools.partial(_mfb_kernel, factor=factor, d_pad=Dp)

    out = pl.pallas_call(
        kernel,
        out_shape=jax.ShapeDtypeStruct((Bp, Dp), jnp.float32),
        grid=grid,
        in_specs=[
            pl.BlockSpec((tile_b, Dp), lambda i: (i, 0)),   # x_gene tile (bf16)
            pl.BlockSpec((tile_b, Dp), lambda i: (i, 0)),   # x_patho tile (bf16)
            pl.BlockSpec((Dp, Hp),     lambda i: (0, 0)),   # W_dataproj (bf16, resident)
            pl.BlockSpec((1, Hp),      lambda i: (0, 0)),   # b_dataproj (f32)
            pl.BlockSpec((Dp, Hp),     lambda i: (0, 0)),   # W_imgproj  (bf16, resident)
            pl.BlockSpec((1, Hp),      lambda i: (0, 0)),   # b_imgproj  (f32)
            pl.BlockSpec((Dp, Dp),     lambda i: (0, 0)),   # W_predict  (bf16, resident)
            pl.BlockSpec((1, Dp),      lambda i: (0, 0)),   # b_predict  (f32, -1e9 pad)
        ],
        out_specs=pl.BlockSpec((tile_b, Dp), lambda i: (i, 0)),        # lane-dense
        compiler_params=pltpu.CompilerParams(
            dimension_semantics=("parallel",),
            vmem_limit_bytes=vmem_limit),
    )(xg, xp, w_d, b_d, w_i, b_i, w_p, b_p)

    return out[:B, :D]


def init_params(key, in_size, factor=1):
    """Xavier-normal-like init matching the PyTorch layer shapes.

    Weights are already transposed to [in_features, out_features]; projection
    output columns are in PyTorch's natural (d-major, k-minor) order, i.e.
    column index o = d*K + k, consistent with iq.view(-1, 1, in_size, K)."""
    h = in_size * factor
    k1, k2, k3, k4, k5, k6 = jax.random.split(key, 6)

    def xavier(k, fan_in, fan_out):
        std = (2.0 / (fan_in + fan_out)) ** 0.5
        return std * jax.random.normal(k, (fan_in, fan_out), dtype=jnp.float32)

    w_d = xavier(k1, in_size, h)
    b_d = 0.1 * jax.random.normal(k4, (h,), dtype=jnp.float32)
    w_i = xavier(k2, in_size, h)
    b_i = 0.1 * jax.random.normal(k5, (h,), dtype=jnp.float32)
    w_p = xavier(k3, in_size, in_size)
    b_p = 0.1 * jax.random.normal(k6, (in_size,), dtype=jnp.float32)
    return w_d, b_d, w_i, b_i, w_p, b_p


def prepare_params(w_d, b_d, w_i, b_i, w_p, b_p, *, in_size, factor):
    """Host-side weight preprocessing for the kernel:
       * permute projection columns from (d-major, k-minor) to factor-major
         (k-major, d-minor) so the K-pool becomes lane-aligned slab adds,
       * zero-pad every per-factor slab and the predict layer to 128 lanes,
       * give padded logit columns a -1e9 bias (log-softmax mask),
       * cast the weight matrices to bf16 (biases stay f32)."""
    D, K = in_size, factor
    Dp = _round_up(D, 128)
    Hp = Dp * K

    def proj(w, b):                       # w: (D, D*K), col o = d*K + k ; b: (D*K,)
        wf = jnp.zeros((Dp, Hp), jnp.float32)
        bf = jnp.zeros((1, Hp), jnp.float32)
        for k in range(K):
            cols = jnp.arange(D) * K + k
            wf = wf.at[:D, k * Dp:k * Dp + D].set(w[:, cols])
            bf = bf.at[0, k * Dp:k * Dp + D].set(b[cols])
        return wf.astype(jnp.bfloat16), bf

    wdp, bdp = proj(w_d, b_d)
    wip, bip = proj(w_i, b_i)

    wpp = jnp.zeros((Dp, Dp), jnp.float32).at[:D, :D].set(w_p).astype(jnp.bfloat16)
    bpp = jnp.full((1, Dp), -1e9, dtype=jnp.float32).at[0, :D].set(b_p)
    return wdp, bdp, wip, bip, wpp, bpp


def _reference(x_gene, x_patho, w_d, b_d, w_i, b_i, w_p, b_p, factor=1):
    """Pure-JAX f32 reference of the PyTorch forward (dropout = identity),
    using the ORIGINAL (unpermuted, unpadded) weights."""
    g = x_gene @ w_d + b_d
    p = x_patho @ w_i + b_i
    iq = g * p
    B, H = iq.shape
    D = H // factor
    pooled = iq.reshape(B, D, factor).sum(axis=-1)
    pooled = jnp.sqrt(jnp.maximum(pooled, 0.0)) - jnp.sqrt(jnp.maximum(-pooled, 0.0))
    norm = jnp.sqrt(jnp.sum(pooled * pooled, axis=-1, keepdims=True))
    pooled = pooled / jnp.maximum(norm, 1e-12)
    logits = pooled @ w_p + b_p
    return jax.nn.log_softmax(logits, axis=-1)


if __name__ == "__main__":
    key = jax.random.PRNGKey(0)
    batch, in_size, factor = 8, 32, 2     # small shapes; K=2 exercises the pool

    kg, kp, kw = jax.random.split(key, 3)
    x_gene = jax.random.normal(kg, (batch, in_size), dtype=jnp.float32)
    x_patho = jax.random.normal(kp, (batch, in_size), dtype=jnp.float32)

    raw_params = init_params(kw, in_size, factor)
    kernel_params = prepare_params(*raw_params, in_size=in_size, factor=factor)

    out = mfb_forward(x_gene, x_patho, *kernel_params, factor=factor)
    out = jax.block_until_ready(out)

    ref = _reference(x_gene, x_patho, *raw_params, factor=factor)
    assert out.shape == (batch, in_size), out.shape
    assert bool(jnp.all(jnp.isfinite(out)))
    # bf16 MXU operands => looser tolerance than the previous all-f32 version.
    max_err = float(jnp.max(jnp.abs(out - ref)))
    assert max_err < 5e-2, f"max |diff| vs f32 reference = {max_err}"

    print("KERNEL_OK")
</pallas_src>

<mosaic_0001>
module attributes {stable_mosaic.version = 11 : i64} {
  func.func @_mfb_kernel(%arg0: i32, %arg1: memref<8x128xbf16, #tpu.memory_space<vmem>>, %arg2: memref<8x128xbf16, #tpu.memory_space<vmem>>, %arg3: memref<128x256xbf16, #tpu.memory_space<vmem>>, %arg4: memref<1x256xf32, #tpu.memory_space<vmem>>, %arg5: memref<128x256xbf16, #tpu.memory_space<vmem>>, %arg6: memref<1x256xf32, #tpu.memory_space<vmem>>, %arg7: memref<128x128xbf16, #tpu.memory_space<vmem>>, %arg8: memref<1x128xf32, #tpu.memory_space<vmem>>, %arg9: memref<8x128xf32, #tpu.memory_space<vmem>>) attributes {dimension_semantics = [#tpu.dimension_semantics<parallel>], iteration_bounds = array<i64: 1>, scalar_prefetch = 0 : i64, scratch_operands = 0 : i64, tpu.core_type = #tpu.core_type<tc>, window_params = [{transform_indices = @transform_0, window_bounds = array<i64: 8, 128>}, {transform_indices = @transform_1, window_bounds = array<i64: 8, 128>}, {pipeline_mode = #tpu.pipeline_mode<synchronous>, transform_indices = @transform_2, window_bounds = array<i64: 128, 256>}, {pipeline_mode = #tpu.pipeline_mode<synchronous>, transform_indices = @transform_3, window_bounds = array<i64: 1, 256>}, {pipeline_mode = #tpu.pipeline_mode<synchronous>, transform_indices = @transform_4, window_bounds = array<i64: 128, 256>}, {pipeline_mode = #tpu.pipeline_mode<synchronous>, transform_indices = @transform_5, window_bounds = array<i64: 1, 256>}, {pipeline_mode = #tpu.pipeline_mode<synchronous>, transform_indices = @transform_6, window_bounds = array<i64: 128, 128>}, {pipeline_mode = #tpu.pipeline_mode<synchronous>, transform_indices = @transform_7, window_bounds = array<i64: 1, 128>}, {transform_indices = @transform_8, window_bounds = array<i64: 8, 128>}]} {
    %c0 = arith.constant 0 : index
    %c0_0 = arith.constant 0 : index
    %0 = vector.load %arg1[%c0, %c0_0] : memref<8x128xbf16, #tpu.memory_space<vmem>>, vector<8x128xbf16>
    %c0_1 = arith.constant 0 : index
    %c0_2 = arith.constant 0 : index
    %1 = vector.load %arg2[%c0_1, %c0_2] : memref<8x128xbf16, #tpu.memory_space<vmem>>, vector<8x128xbf16>
    %c0_3 = arith.constant 0 : index
    %c0_4 = arith.constant 0 : index
    %2 = vector.load %arg3[%c0_3, %c0_4] : memref<128x256xbf16, #tpu.memory_space<vmem>>, vector<128x256xbf16>
    %cst = arith.constant dense<0.000000e+00> : vector<8x256xf32>
    %3 = tpu.matmul %0, %2, %cst {dimension_numbers = #tpu.dot_dimension_numbers<[1], [0], [0], [1], [0, 0, 1, 1], [], []>} : vector<8x128xbf16>, vector<128x256xbf16>, vector<8x256xf32> -> vector<8x256xf32>
    %c0_5 = arith.constant 0 : index
    %c0_6 = arith.constant 0 : index
    %4 = vector.load %arg4[%c0_5, %c0_6] : memref<1x256xf32, #tpu.memory_space<vmem>>, vector<1x256xf32>
    %5 = vector.broadcast %4 : vector<1x256xf32> to vector<8x256xf32>
    %6 = arith.addf %3, %5 : vector<8x256xf32>
    %c0_7 = arith.constant 0 : index
    %c0_8 = arith.constant 0 : index
    %7 = vector.load %arg5[%c0_7, %c0_8] : memref<128x256xbf16, #tpu.memory_space<vmem>>, vector<128x256xbf16>
    %cst_9 = arith.constant dense<0.000000e+00> : vector<8x256xf32>
    %8 = tpu.matmul %1, %7, %cst_9 {dimension_numbers = #tpu.dot_dimension_numbers<[1], [0], [0], [1], [0, 0, 1, 1], [], []>} : vector<8x128xbf16>, vector<128x256xbf16>, vector<8x256xf32> -> vector<8x256xf32>
    %c0_10 = arith.constant 0 : index
    %c0_11 = arith.constant 0 : index
    %9 = vector.load %arg6[%c0_10, %c0_11] : memref<1x256xf32, #tpu.memory_space<vmem>>, vector<1x256xf32>
    %10 = vector.broadcast %9 : vector<1x256xf32> to vector<8x256xf32>
    %11 = arith.addf %8, %10 : vector<8x256xf32>
    %12 = arith.mulf %6, %11 : vector<8x256xf32>
    %13 = vector.extract_strided_slice %12 {offsets = [0, 0], sizes = [8, 128], strides = [1, 1]} : vector<8x256xf32> to vector<8x128xf32>
    %14 = vector.extract_strided_slice %12 {offsets = [0, 128], sizes = [8, 128], strides = [1, 1]} : vector<8x256xf32> to vector<8x128xf32>
    %15 = arith.addf %13, %14 : vector<8x128xf32>
    %cst_12 = arith.constant 0.000000e+00 : f32
    %16 = vector.broadcast %cst_12 : f32 to vector<8x128xf32>
    %17 = arith.cmpf olt, %15, %16 : vector<8x128xf32>
    %cst_13 = arith.constant -1.000000e+00 : f32
    %cst_14 = arith.constant 1.000000e+00 : f32
    %18 = vector.broadcast %cst_13 : f32 to vector<8x128xf32>
    %19 = vector.broadcast %cst_14 : f32 to vector<8x128xf32>
    %20 = arith.select %17, %18, %19 : vector<8x128xi1>, vector<8x128xf32>
    %21 = math.absf %15 : vector<8x128xf32>
    %22 = math.sqrt %21 : vector<8x128xf32>
    %23 = arith.mulf %20, %22 : vector<8x128xf32>
    %24 = arith.mulf %23, %23 : vector<8x128xf32>
    %cst_15 = arith.constant dense<0.000000e+00> : vector<8xf32>
    %25 = vector.multi_reduction <add>, %24, %cst_15 [1] : vector<8x128xf32> to vector<8xf32>
    %26 = vector.shape_cast %25 : vector<8xf32> to vector<8x1xf32>
    %cst_16 = arith.constant 1.000000e-24 : f32
    %27 = vector.broadcast %cst_16 : f32 to vector<8x1xf32>
    %28 = arith.maximumf %26, %27 : vector<8x1xf32>
    %29 = math.rsqrt %28 : vector<8x1xf32>
    %30 = vector.broadcast %29 : vector<8x1xf32> to vector<8x128xf32>
    %31 = arith.mulf %23, %30 : vector<8x128xf32>
    %32 = arith.truncf %31 : vector<8x128xf32> to vector<8x128xbf16>
    %c0_17 = arith.constant 0 : index
    %c0_18 = arith.constant 0 : index
    %33 = vector.load %arg7[%c0_17, %c0_18] : memref<128x128xbf16, #tpu.memory_space<vmem>>, vector<128x128xbf16>
    %cst_19 = arith.constant dense<0.000000e+00> : vector<8x128xf32>
    %34 = tpu.matmul %32, %33, %cst_19 {dimension_numbers = #tpu.dot_dimension_numbers<[1], [0], [0], [1], [0, 0, 1, 1], [], []>} : vector<8x128xbf16>, vector<128x128xbf16>, vector<8x128xf32> -> vector<8x128xf32>
    %c0_20 = arith.constant 0 : index
    %c0_21 = arith.constant 0 : index
    %35 = vector.load %arg8[%c0_20, %c0_21] : memref<1x128xf32, #tpu.memory_space<vmem>>, vector<1x128xf32>
    %36 = vector.broadcast %35 : vector<1x128xf32> to vector<8x128xf32>
    %37 = arith.addf %34, %36 : vector<8x128xf32>
    %cst_22 = arith.constant dense<0xFF800000> : vector<8xf32>
    %38 = vector.multi_reduction <maximumf>, %37, %cst_22 [1] : vector<8x128xf32> to vector<8xf32>
    %39 = vector.shape_cast %38 : vector<8xf32> to vector<8x1xf32>
    %40 = vector.broadcast %39 : vector<8x1xf32> to vector<8x128xf32>
    %41 = arith.subf %37, %40 : vector<8x128xf32>
    %42 = math.exp %41 : vector<8x128xf32>
    %cst_23 = arith.constant dense<0.000000e+00> : vector<8xf32>
    %43 = vector.multi_reduction <add>, %42, %cst_23 [1] : vector<8x128xf32> to vector<8xf32>
    %44 = vector.shape_cast %43 : vector<8xf32> to vector<8x1xf32>
    %45 = math.log %44 : vector<8x1xf32>
    %46 = vector.broadcast %45 : vector<8x1xf32> to vector<8x128xf32>
    %47 = arith.subf %41, %46 : vector<8x128xf32>
    %c0_24 = arith.constant 0 : index
    %c0_25 = arith.constant 0 : index
    %48 = vector.load %arg9[%c0_24, %c0_25] : memref<8x128xf32, #tpu.memory_space<vmem>>, vector<8x128xf32>
    tpu.vector_store %arg9[%c0_24, %c0_25], %47 {strides = array<i32>} : memref<8x128xf32, #tpu.memory_space<vmem>>, vector<8x128xf32>,
    return
  }
  func.func @transform_0(%arg0: i32) -> (i32, i32) {
    %c0_i32 = arith.constant 0 : i32
    %c0_i32_0 = arith.constant 0 : i32
    return %arg0, %c0_i32 : i32, i32
  }
  func.func @transform_1(%arg0: i32) -> (i32, i32) {
    %c0_i32 = arith.constant 0 : i32
    %c0_i32_0 = arith.constant 0 : i32
    return %arg0, %c0_i32 : i32, i32
  }
  func.func @transform_2(%arg0: i32) -> (i32, i32) {
    %c0_i32 = arith.constant 0 : i32
    %c0_i32_0 = arith.constant 0 : i32
    %c0_i32_1 = arith.constant 0 : i32
    return %c0_i32, %c0_i32_0 : i32, i32
  }
  func.func @transform_3(%arg0: i32) -> (i32, i32) {
    %c0_i32 = arith.constant 0 : i32
    %c0_i32_0 = arith.constant 0 : i32
    %c0_i32_1 = arith.constant 0 : i32
    return %c0_i32, %c0_i32_0 : i32, i32
  }
  func.func @transform_4(%arg0: i32) -> (i32, i32) {
    %c0_i32 = arith.constant 0 : i32
    %c0_i32_0 = arith.constant 0 : i32
    %c0_i32_1 = arith.constant 0 : i32
    return %c0_i32, %c0_i32_0 : i32, i32
  }
  func.func @transform_5(%arg0: i32) -> (i32, i32) {
    %c0_i32 = arith.constant 0 : i32
    %c0_i32_0 = arith.constant 0 : i32
    %c0_i32_1 = arith.constant 0 : i32
    return %c0_i32, %c0_i32_0 : i32, i32
  }
  func.func @transform_6(%arg0: i32) -> (i32, i32) {
    %c0_i32 = arith.constant 0 : i32
    %c0_i32_0 = arith.constant 0 : i32
    %c0_i32_1 = arith.constant 0 : i32
    return %c0_i32, %c0_i32_0 : i32, i32
  }
  func.func @transform_7(%arg0: i32) -> (i32, i32) {
    %c0_i32 = arith.constant 0 : i32
    %c0_i32_0 = arith.constant 0 : i32
    %c0_i32_1 = arith.constant 0 : i32
    return %c0_i32, %c0_i32_0 : i32, i32
  }
  func.func @transform_8(%arg0: i32) -> (i32, i32) {
    %c0_i32 = arith.constant 0 : i32
    %c0_i32_0 = arith.constant 0 : i32
    return %arg0, %c0_i32 : i32, i32
  }
}

</mosaic_0001>

<llo_original>
// kernel: mfb_forward.1
$region0: #{mfb_forward.1}
  #allocation0 [shape = 'u32[]', space=smem, size = 0x4, offset = 0x4, fixed_abs, tag = 'smem constant byte address 0x4 - core index']
  #allocation1 [shape = 'u32[72,128]{1,0:T(1,128)}', space=vmem, size = 0x9000, scoped, tag = 'internal scratch']
  %s0 = inlined_call_operand.vmem [shape: bf16[8,128], index: 0, kind: input, shape index: {}]
  %s1 = inlined_call_operand.vmem [shape: bf16[8,128], index: 1, kind: input, shape index: {}]
  %s2 = inlined_call_operand.hbm [shape: bf16[128,256], index: 2, kind: input, shape index: {}]
  %s3 = inlined_call_operand.vmem [shape: f32[1,256], index: 3, kind: input, shape index: {}]
  %s4 = inlined_call_operand.hbm [shape: bf16[128,256], index: 4, kind: input, shape index: {}]
  %s5 = inlined_call_operand.vmem [shape: f32[1,256], index: 5, kind: input, shape index: {}]
  %s6 = inlined_call_operand.hbm [shape: bf16[128,128], index: 6, kind: input, shape index: {}]
  %s7 = inlined_call_operand.vmem [shape: f32[1,128], index: 7, kind: input, shape index: {}]
  %s8 = inlined_call_operand.hbm [shape: f32[8,128], index: 8, kind: output, shape index: {}]
  %s9 = sld [smem:[#allocation0]]
  $region54: #{mfb_forward.1} parent=0
    _
  %s11 = ssub.s32 1, %s9
  %s12 = scalar_select 0, %s11, %s9
  $region1: #{mfb_forward.1} parent=0
    #allocation2 [shape = 'u8[65536]{0}', space=vmem, size = 0x10000, scoped, tag = 'input window, operand 2, single buffered']
    #allocation3 [shape = 's32[1]{0}', space=sflag, size = 0x4, scoped, tag = 'scoped memory for mfb_forward.1']
    #allocation4 [shape = 's32[1]{0}', space=sflag, size = 0x4, scoped, tag = 'scoped memory for mfb_forward.1']
    #allocation5 [shape = 'u8[65536]{0}', space=vmem, size = 0x10000, scoped, tag = 'input window, operand 4, single buffered']
    #allocation6 [shape = 's32[1]{0}', space=sflag, size = 0x4, scoped, tag = 'scoped memory for mfb_forward.1']
    #allocation7 [shape = 'u8[32768]{0}', space=vmem, size = 0x8000, scoped, tag = 'input window, operand 6, single buffered']
    #allocation8 [shape = 'u8[4096]{0}', space=vmem, size = 0x1000, scoped, tag = 'output window, operand 0, single buffered']
    %13 = vsyncpa [#allocation3], 0
    %14 = vsyncpa [#allocation6], 0
    %15 = vsyncpa [#allocation4], 0
    // Predicated region
    $region2: #{mfb_forward.1} parent=1 // pred_check
      _
    $region3: #{mfb_forward.1} parent=1 // pred_check_branch
      %17 = sbr.rel (0) target = $region5
    $region4: #{mfb_forward.1} parent=1 // pred_region
      _
    $region5: #{mfb_forward.1} parent=1 // pred_fallthru
      _
    // Predicated region
    $region6: #{mfb_forward.1} parent=1 // pred_check
      _
    $region7: #{mfb_forward.1} parent=1 // pred_check_branch
      %19 = sbr.rel (0) target = $region9
    $region8: #{mfb_forward.1} parent=1 // pred_region
      _
    $region9: #{mfb_forward.1} parent=1 // pred_fallthru
      _
    // Predicated region
    $region10: #{mfb_forward.1} parent=1 // pred_check
      _
    $region11: #{mfb_forward.1} parent=1 // pred_check_branch
      %21 = sbr.rel (0) target = $region13
    $region12: #{mfb_forward.1} parent=1 // pred_region
      %23 = vsyncadd [#allocation3], 0
      %s24 = sshll.u32 %s2, 4
      %s25 = int_to_ptr.hbm [resolvable:$true] %s24
      %s26 = sshll.u32 [#allocation2], 4
      %s27 = int_to_ptr.vmem [resolvable:$true] %s26
      %32 = dma.hbm_to_vmem [thread:$0]  %s25, 2048, %s27, [#allocation3], 128, 128, 8
    $region13: #{mfb_forward.1} parent=1 // pred_fallthru
      _
    // Predicated region
    $region14: #{mfb_forward.1} parent=1 // pred_check
      _
    $region15: #{mfb_forward.1} parent=1 // pred_check_branch
      %34 = sbr.rel (0) target = $region17
    $region16: #{mfb_forward.1} parent=1 // pred_region
      _
    $region17: #{mfb_forward.1} parent=1 // pred_fallthru
      _
    // Predicated region
    $region18: #{mfb_forward.1} parent=1 // pred_check
      _
    $region19: #{mfb_forward.1} parent=1 // pred_check_branch
      %36 = sbr.rel (0) target = $region21
    $region20: #{mfb_forward.1} parent=1 // pred_region
      %38 = vsyncadd [#allocation6], 0
      %s39 = sshll.u32 %s4, 4
      %s40 = int_to_ptr.hbm [resolvable:$true] %s39
      %s41 = sshll.u32 [#allocation5], 4
      %s42 = int_to_ptr.vmem [resolvable:$true] %s41
      %47 = dma.hbm_to_vmem [thread:$0]  %s40, 2048, %s42, [#allocation6], 128, 128, 8
    $region21: #{mfb_forward.1} parent=1 // pred_fallthru
      _
    // Predicated region
    $region22: #{mfb_forward.1} parent=1 // pred_check
      _
    $region23: #{mfb_forward.1} parent=1 // pred_check_branch
      %49 = sbr.rel (0) target = $region25
    $region24: #{mfb_forward.1} parent=1 // pred_region
      _
    $region25: #{mfb_forward.1} parent=1 // pred_fallthru
      _
    // Predicated region
    $region26: #{mfb_forward.1} parent=1 // pred_check
      _
    $region27: #{mfb_forward.1} parent=1 // pred_check_branch
      %51 = sbr.rel (0) target = $region29
    $region28: #{mfb_forward.1} parent=1 // pred_region
      %53 = vsyncadd [#allocation6], 0
      %s54 = sshll.u32 %s6, 4
      %s55 = int_to_ptr.hbm [resolvable:$true] %s54
      %s56 = sshll.u32 [#allocation7], 4
      %s57 = int_to_ptr.vmem [resolvable:$true] %s56
      %62 = dma.hbm_to_vmem [thread:$0]  %s55, 1024, %s57, [#allocation6], 64, 64, 4
    $region29: #{mfb_forward.1} parent=1 // pred_fallthru
      _
    // Predicated region
    $region30: #{mfb_forward.1} parent=1 // pred_check
      _
    $region31: #{mfb_forward.1} parent=1 // pred_check_branch
      %64 = sbr.rel (0) target = $region33
    $region32: #{mfb_forward.1} parent=1 // pred_region
      _
    $region33: #{mfb_forward.1} parent=1 // pred_fallthru
      _
    // Predicated region
    $region34: #{mfb_forward.1} parent=1 // pred_check
      _
    $region35: #{mfb_forward.1} parent=1 // pred_check_branch
      %66 = sbr.rel (0) target = $region37
    $region36: #{mfb_forward.1} parent=1 // pred_region
      %68 = dma.done [#allocation3], 2048
    $region37: #{mfb_forward.1} parent=1 // pred_fallthru
      _
    // Predicated region
    $region38: #{mfb_forward.1} parent=1 // pred_check
      _
    $region39: #{mfb_forward.1} parent=1 // pred_check_branch
      %70 = sbr.rel (0) target = $region41
    $region40: #{mfb_forward.1} parent=1 // pred_region
      %72 = dma.done [#allocation6], 2048
    $region41: #{mfb_forward.1} parent=1 // pred_fallthru
      _
    // Predicated region
    $region42: #{mfb_forward.1} parent=1 // pred_check
      _
    $region43: #{mfb_forward.1} parent=1 // pred_check_branch
      %74 = sbr.rel (0) target = $region45
    $region44: #{mfb_forward.1} parent=1 // pred_region
      %76 = dma.done [#allocation6], 1024
    $region45: #{mfb_forward.1} parent=1 // pred_fallthru
      _
    %v77 = vld [vmem:[%s0] sm:$0xf]
    %v78 = vld [vmem:[%s1] sm:$0xf]
    %v79 = vld [vmem:[#allocation2] sm:$0xff]
    %v80 = vld [vmem:[#allocation2 + $0x8] sm:$0xff]
    %v81 = vld [vmem:[#allocation2 + $0x10] sm:$0xff]
    %v82 = vld [vmem:[#allocation2 + $0x18] sm:$0xff]
    %v83 = vld [vmem:[#allocation2 + $0x20] sm:$0xff]
    %v84 = vld [vmem:[#allocation2 + $0x28] sm:$0xff]
    %v85 = vld [vmem:[#allocation2 + $0x30] sm:$0xff]
    %v86 = vld [vmem:[#allocation2 + $0x38] sm:$0xff]
    %v87 = vld [vmem:[#allocation2 + $0x40] sm:$0xff]
    %v88 = vld [vmem:[#allocation2 + $0x48] sm:$0xff]
    %v89 = vld [vmem:[#allocation2 + $0x50] sm:$0xff]
    %v90 = vld [vmem:[#allocation2 + $0x58] sm:$0xff]
    %v91 = vld [vmem:[#allocation2 + $0x60] sm:$0xff]
    %v92 = vld [vmem:[#allocation2 + $0x68] sm:$0xff]
    %v93 = vld [vmem:[#allocation2 + $0x70] sm:$0xff]
    %v94 = vld [vmem:[#allocation2 + $0x78] sm:$0xff]
    %v95 = vld [vmem:[%s3] sm:$0x3]
    %v97 = vperm.slane %v95, 0
    %v98 = vperm.slane %v95, 1
    %v117 = vunpack.c.l.b16 %v79
    %v118 = vunpack.c.h.b16 %v79
    %v119 = vunpack.c.l.b16 %v80
    %v120 = vunpack.c.h.b16 %v80
    %v121 = vunpack.c.l.b16 %v81
    %v122 = vunpack.c.h.b16 %v81
    %v123 = vunpack.c.l.b16 %v82
    %v124 = vunpack.c.h.b16 %v82
    %v125 = vunpack.c.l.b16 %v83
    %v126 = vunpack.c.h.b16 %v83
    %v127 = vunpack.c.l.b16 %v84
    %v128 = vunpack.c.h.b16 %v84
    %v129 = vunpack.c.l.b16 %v85
    %v130 = vunpack.c.h.b16 %v85
    %v131 = vunpack.c.l.b16 %v86
    %v132 = vunpack.c.h.b16 %v86
    %v133 = vunpack.c.l.b16 %v87
    %v134 = vunpack.c.h.b16 %v87
    %v135 = vunpack.c.l.b16 %v88
    %v136 = vunpack.c.h.b16 %v88
    %v137 = vunpack.c.l.b16 %v89
    %v138 = vunpack.c.h.b16 %v89
    %v139 = vunpack.c.l.b16 %v90
    %v140 = vunpack.c.h.b16 %v90
    %v141 = vunpack.c.l.b16 %v91
    %v142 = vunpack.c.h.b16 %v91
    %v143 = vunpack.c.l.b16 %v92
    %v144 = vunpack.c.h.b16 %v92
    %v145 = vunpack.c.l.b16 %v93
    %v146 = vunpack.c.h.b16 %v93
    %v147 = vunpack.c.l.b16 %v94
    %v148 = vunpack.c.h.b16 %v94
    %v149 = vpack.c.b16 %v119, %v117
    %v150 = vpack.c.b16 %v120, %v118
    %v151 = vpack.c.b16 %v123, %v121
    %v152 = vpack.c.b16 %v124, %v122
    %v153 = vpack.c.b16 %v127, %v125
    %v154 = vpack.c.b16 %v128, %v126
    %v155 = vpack.c.b16 %v131, %v129
    %v156 = vpack.c.b16 %v132, %v130
    %v157 = vpack.c.b16 %v135, %v133
    %v158 = vpack.c.b16 %v136, %v134
    %v159 = vpack.c.b16 %v139, %v137
    %v160 = vpack.c.b16 %v140, %v138
    %v161 = vpack.c.b16 %v143, %v141
    %v162 = vpack.c.b16 %v144, %v142
    %v163 = vpack.c.b16 %v147, %v145
    %v164 = vpack.c.b16 %v148, %v146
    %181 = vmatpush.bf16.msra.mxu0 %v163
    %182 = vmatpush.bf16.msra.mxu0 %v161
    %183 = vmatpush.bf16.msra.mxu0 %v159
    %184 = vmatpush.bf16.msra.mxu0 %v157
    %185 = vmatpush.bf16.msra.mxu0 %v155
    %186 = vmatpush.bf16.msra.mxu0 %v153
    %187 = vmatpush.bf16.msra.mxu0 %v151
    %188 = vmatpush.bf16.msra.mxu0 %v149
    %189 = vmatmul.bf16.gmra.mxu0 %v77
    %v190 = vpop.f32.mrf.mxu0
    %v191 = vadd.f32 %v97, %v190
    %v192 = vpop.f32.mrf.mxu0
    %193 = vdwg.mxu0
    %194 = vmatpush.bf16.msra.mxu0 %v164
    %195 = vmatpush.bf16.msra.mxu0 %v162
    %196 = vmatpush.bf16.msra.mxu0 %v160
    %197 = vmatpush.bf16.msra.mxu0 %v158
    %198 = vmatpush.bf16.msra.mxu0 %v156
    %199 = vmatpush.bf16.msra.mxu0 %v154
    %200 = vmatpush.bf16.msra.mxu0 %v152
    %201 = vmatpush.bf16.msra.mxu0 %v150
    %202 = vmatmul.bf16.gmra.mxu0 %v77
    %v203 = vpop.f32.mrf.mxu0
    %v204 = vadd.f32 %v98, %v203
    %v205 = vpop.f32.mrf.mxu0
    %206 = vdwg.mxu0
    %v207 = vld [vmem:[#allocation5] sm:$0xff]
    %v208 = vld [vmem:[#allocation5 + $0x8] sm:$0xff]
    %v209 = vld [vmem:[#allocation5 + $0x10] sm:$0xff]
    %v210 = vld [vmem:[#allocation5 + $0x18] sm:$0xff]
    %v211 = vld [vmem:[#allocation5 + $0x20] sm:$0xff]
    %v212 = vld [vmem:[#allocation5 + $0x28] sm:$0xff]
    %v213 = vld [vmem:[#allocation5 + $0x30] sm:$0xff]
    %v214 = vld [vmem:[#allocation5 + $0x38] sm:$0xff]
    %v215 = vld [vmem:[#allocation5 + $0x40] sm:$0xff]
    %v216 = vld [vmem:[#allocation5 + $0x48] sm:$0xff]
    %v217 = vld [vmem:[#allocation5 + $0x50] sm:$0xff]
    %v218 = vld [vmem:[#allocation5 + $0x58] sm:$0xff]
    %v219 = vld [vmem:[#allocation5 + $0x60] sm:$0xff]
    %v220 = vld [vmem:[#allocation5 + $0x68] sm:$0xff]
    %v221 = vld [vmem:[#allocation5 + $0x70] sm:$0xff]
    %v222 = vld [vmem:[#allocation5 + $0x78] sm:$0xff]
    %v223 = vld [vmem:[%s5] sm:$0x3]
    %v225 = vperm.slane %v223, 0
    %v226 = vperm.slane %v223, 1
    %v245 = vunpack.c.l.b16 %v207
    %v246 = vunpack.c.h.b16 %v207
    %v247 = vunpack.c.l.b16 %v208
    %v248 = vunpack.c.h.b16 %v208
    %v249 = vunpack.c.l.b16 %v209
    %v250 = vunpack.c.h.b16 %v209
    %v251 = vunpack.c.l.b16 %v210
    %v252 = vunpack.c.h.b16 %v210
    %v253 = vunpack.c.l.b16 %v211
    %v254 = vunpack.c.h.b16 %v211
    %v255 = vunpack.c.l.b16 %v212
    %v256 = vunpack.c.h.b16 %v212
    %v257 = vunpack.c.l.b16 %v213
    %v258 = vunpack.c.h.b16 %v213
    %v259 = vunpack.c.l.b16 %v214
    %v260 = vunpack.c.h.b16 %v214
    %v261 = vunpack.c.l.b16 %v215
    %v262 = vunpack.c.h.b16 %v215
    %v263 = vunpack.c.l.b16 %v216
    %v264 = vunpack.c.h.b16 %v216
    %v265 = vunpack.c.l.b16 %v217
    %v266 = vunpack.c.h.b16 %v217
    %v267 = vunpack.c.l.b16 %v218
    %v268 = vunpack.c.h.b16 %v218
    %v269 = vunpack.c.l.b16 %v219
    %v270 = vunpack.c.h.b16 %v219
    %v271 = vunpack.c.l.b16 %v220
    %v272 = vunpack.c.h.b16 %v220
    %v273 = vunpack.c.l.b16 %v221
    %v274 = vunpack.c.h.b16 %v221
    %v275 = vunpack.c.l.b16 %v222
    %v276 = vunpack.c.h.b16 %v222
    %v277 = vpack.c.b16 %v247, %v245
    %v278 = vpack.c.b16 %v248, %v246
    %v279 = vpack.c.b16 %v251, %v249
    %v280 = vpack.c.b16 %v252, %v250
    %v281 = vpack.c.b16 %v255, %v253
    %v282 = vpack.c.b16 %v256, %v254
    %v283 = vpack.c.b16 %v259, %v257
    %v284 = vpack.c.b16 %v260, %v258
    %v285 = vpack.c.b16 %v263, %v261
    %v286 = vpack.c.b16 %v264, %v262
    %v287 = vpack.c.b16 %v267, %v265
    %v288 = vpack.c.b16 %v268, %v266
    %v289 = vpack.c.b16 %v271, %v269
    %v290 = vpack.c.b16 %v272, %v270
    %v291 = vpack.c.b16 %v275, %v273
    %v292 = vpack.c.b16 %v276, %v274
    %309 = vmatpush.bf16.msra.mxu0 %v291
    %310 = vmatpush.bf16.msra.mxu0 %v289
    %311 = vmatpush.bf16.msra.mxu0 %v287
    %312 = vmatpush.bf16.msra.mxu0 %v285
    %313 = vmatpush.bf16.msra.mxu0 %v283
    %314 = vmatpush.bf16.msra.mxu0 %v281
    %315 = vmatpush.bf16.msra.mxu0 %v279
    %316 = vmatpush.bf16.msra.mxu0 %v277
    %317 = vmatmul.bf16.gmra.mxu0 %v78
    %v318 = vpop.f32.mrf.mxu0
    %v319 = vadd.f32 %v225, %v318
    %v320 = vpop.f32.mrf.mxu0
    %321 = vdwg.mxu0
    %322 = vmatpush.bf16.msra.mxu0 %v292
    %323 = vmatpush.bf16.msra.mxu0 %v290
    %324 = vmatpush.bf16.msra.mxu0 %v288
    %325 = vmatpush.bf16.msra.mxu0 %v286
    %326 = vmatpush.bf16.msra.mxu0 %v284
    %327 = vmatpush.bf16.msra.mxu0 %v282
    %328 = vmatpush.bf16.msra.mxu0 %v280
    %329 = vmatpush.bf16.msra.mxu0 %v278
    %330 = vmatmul.bf16.gmra.mxu0 %v78
    %v331 = vpop.f32.mrf.mxu0
    %v332 = vadd.f32 %v226, %v331
    %v333 = vpop.f32.mrf.mxu0
    %334 = vdwg.mxu0
    %v335 = vmul.f32 %v191, %v319
    %v336 = vmul.f32 %v204, %v332
    %v337 = vadd.f32 %v335, %v336
    %vm338 = vcmp.lt.f32.partialorder %v337, 0.0
    %v339 = vsel %vm338, -1.0, 1.0
    %v340 = vand.u32 2147483647, %v337
    %v341 = vrsqrt.pop %v340
    %v342 = vmul.f32 %v341, %v340
    %v343 = vmul.f32 %v342, %v341
    %v344 = vmul.f32 0.5, %v343
    %v345 = vsub.f32 1.5, %v344
    %v346 = vmul.f32 %v341, %v345
    %v347 = vmul.f32 %v340, %v346
    %vm348 = vcmp.eq.f32.partialorder %v340, inf
    %v349 = vsel %vm348, %v340, %v347
    %vm350 = vcmp.eq.f32.partialorder %v340, 0.0
    %v351 = vand.u32 %v340, 2147483648
    %v352 = vsel %vm350, %v351, %v349
    %v353 = vmul.f32 %v339, %v352
    %v354 = vmul.f32 %v353, %v353
    %355 = vadd.xlane.f32.xlu0 %v354
    %v356 = vpop.xlane.xlu0 %355
    %v357 = vmax.f32 %v356, 1e-24
    %v358 = vrsqrt.pop %v357
    %v359 = vmul.f32 %v358, %v357
    %v360 = vmul.f32 %v359, %v358
    %v361 = vmul.f32 0.5, %v360
    %v362 = vsub.f32 1.5, %v361
    %v363 = vmul.f32 %v358, %v362
    %vm364 = vweird.f32 %v357
    %vm365 = vweird.f32 %v358
    %vm366 = vmor %vm364, %vm365
    %v367 = vsel %vm366, %v358, %v363
    %v368 = vmul.f32 %v353, %v367
    %v369 = vpack.c.bf16 %v368, %v368
    %v370 = vld [vmem:[#allocation7] sm:$0xf]
    %v371 = vld [vmem:[#allocation7 + $0x4] sm:$0xf]
    %v372 = vld [vmem:[#allocation7 + $0x8] sm:$0xf]
    %v373 = vld [vmem:[#allocation7 + $0xc] sm:$0xf]
    %v374 = vld [vmem:[#allocation7 + $0x10] sm:$0xf]
    %v375 = vld [vmem:[#allocation7 + $0x14] sm:$0xf]
    %v376 = vld [vmem:[#allocation7 + $0x18] sm:$0xf]
    %v377 = vld [vmem:[#allocation7 + $0x1c] sm:$0xf]
    %v378 = vld [vmem:[#allocation7 + $0x20] sm:$0xf]
    %v379 = vld [vmem:[#allocation7 + $0x24] sm:$0xf]
    %v380 = vld [vmem:[#allocation7 + $0x28] sm:$0xf]
    %v381 = vld [vmem:[#allocation7 + $0x2c] sm:$0xf]
    %v382 = vld [vmem:[#allocation7 + $0x30] sm:$0xf]
    %v383 = vld [vmem:[#allocation7 + $0x34] sm:$0xf]
    %v384 = vld [vmem:[#allocation7 + $0x38] sm:$0xf]
    %v385 = vld [vmem:[#allocation7 + $0x3c] sm:$0xf]
    %v386 = vld [vmem:[%s7] sm:$0x1]
    %v388 = vperm.slane %v386, 0
    %v406 = vunpack.c.l.b16 %v370
    %v407 = vunpack.c.l.b16 %v371
    %v408 = vunpack.c.l.b16 %v372
    %v409 = vunpack.c.l.b16 %v373
    %v410 = vunpack.c.l.b16 %v374
    %v411 = vunpack.c.l.b16 %v375
    %v412 = vunpack.c.l.b16 %v376
    %v413 = vunpack.c.l.b16 %v377
    %v414 = vunpack.c.l.b16 %v378
    %v415 = vunpack.c.l.b16 %v379
    %v416 = vunpack.c.l.b16 %v380
    %v417 = vunpack.c.l.b16 %v381
    %v418 = vunpack.c.l.b16 %v382
    %v419 = vunpack.c.l.b16 %v383
    %v420 = vunpack.c.l.b16 %v384
    %v421 = vunpack.c.l.b16 %v385
    %v422 = vpack.c.b16 %v407, %v406
    %v423 = vpack.c.b16 %v409, %v408
    %v424 = vpack.c.b16 %v411, %v410
    %v425 = vpack.c.b16 %v413, %v412
    %v426 = vpack.c.b16 %v415, %v414
    %v427 = vpack.c.b16 %v417, %v416
    %v428 = vpack.c.b16 %v419, %v418
    %v429 = vpack.c.b16 %v421, %v420
    %438 = vmatpush.bf16.msra.mxu0 %v429
    %439 = vmatpush.bf16.msra.mxu0 %v428
    %440 = vmatpush.bf16.msra.mxu0 %v427
    %441 = vmatpush.bf16.msra.mxu0 %v426
    %442 = vmatpush.bf16.msra.mxu0 %v425
    %443 = vmatpush.bf16.msra.mxu0 %v424
    %444 = vmatpush.bf16.msra.mxu0 %v423
    %445 = vmatpush.bf16.msra.mxu0 %v422
    %446 = vmatmul.bf16.gmra.mxu0 %v369
    %v447 = vpop.f32.mrf.mxu0
    %v448 = vadd.f32 %v388, %v447
    %v449 = vpop.f32.mrf.mxu0
    %450 = vdwg.mxu0
    %451 = vmax.xlane.f32.xlu0 %v448
    %v452 = vpop.xlane.xlu0 %451
    %v453 = vsub.f32 %v448, %v452
    %v454 = vmul.f32 %v453, 1.442695
    %v455 = vpow.pop %v454
    %456 = vadd.xlane.f32.xlu0 %v455
    %v457 = vpop.xlane.xlu0 %456
    %v458 = vlog2.pop %v457
    %v459 = vmul.f32 %v458, 0.6931472
    %v460 = vsub.f32 %v453, %v459
    %461 = vst [vmem:[#allocation8] sm:$0xff] %v460
    // Predicated region
    $region46: #{mfb_forward.1} parent=1 // pred_check
      _
    $region47: #{mfb_forward.1} parent=1 // pred_check_branch
      %463 = sbr.rel (0) target = $region49
    $region48: #{mfb_forward.1} parent=1 // pred_region
      %465 = vsyncadd [#allocation4], 0
      %s467 = sshll.u32 [#allocation8], 4
      %s468 = int_to_ptr.vmem [resolvable:$true] %s467
      %s469 = sshll.u32 %s8, 4
      %s470 = int_to_ptr.hbm [resolvable:$true] %s469
      %472 = dma.vmem_to_hbm [thread:$0]  %s468, 128, %s470, [#allocation4]
    $region49: #{mfb_forward.1} parent=1 // pred_fallthru
      _
    // Predicated region
    $region50: #{mfb_forward.1} parent=1 // pred_check
      _
    $region51: #{mfb_forward.1} parent=1 // pred_check_branch
      %474 = sbr.rel (0) target = $region53
    $region52: #{mfb_forward.1} parent=1 // pred_region
      %476 = dma.done [#allocation4], 128
    $region53: #{mfb_forward.1} parent=1 // pred_fallthru
      _
    %477 = vsyncpa [#allocation3], 1
    %478 = vsyncpa [#allocation6], 1
    %479 = vsyncpa [#allocation4], 1

</llo_original>
